<compile_context>
chip_gen: v7x
topology: tpu7x:2x2x1
jax: 0.10.0
libtpu: 0.0.40
codegen_flags: <defaults>
</compile_context>

<pallas_src>
import numpy as np
import jax
import jax.numpy as jnp
from jax.experimental import pallas as pl
from jax.experimental.pallas import tpu as pltpu


_LANE = 128      # TPU lane width (last dim)
_SUBLANE = 8     # TPU sublane width (second-to-last dim)
# Rows per grid step.  (256, 128)-f32 tiles are tiny; this stays far under
# the 32 MiB default scoped-VMEM limit and v7x's 64 MiB physical VMEM even
# with double buffering + resident weights.
_MAX_TILE_B = 256


def _round_up(n, m):
    return ((n + m - 1) // m) * m


# ----------------------------------------------------------------------------
# Fused Pallas kernel: all MLP blocks + head for one batch tile
# ----------------------------------------------------------------------------
def _fused_mlp_kernel(x_ref, w_ref, b_ref, gw_ref, gb_ref, hw_ref, hb_ref, o_ref):
    """x:(TB,DP) f32; w/gw:(L,DP,DP) bf16; b/gb:(L,1,DP) f32;
    hw:(DP,CP) bf16; hb:(1,CP) f32; out:(TB,CP) f32."""
    n_layers = w_ref.shape[0]
    h = x_ref[...]                                            # f32 activations
    for i in range(n_layers):                                 # static unroll (small)
        # Linear (bf16 MXU inputs, f32 accumulate) + bias
        z = jnp.dot(h.astype(jnp.bfloat16), w_ref[i],
                    preferred_element_type=jnp.float32) + b_ref[i]
        # Mish(z) = z * tanh(softplus(z)); stable single-exp form:
        #   u = exp(-|z|)
        #   z>=0: tanh(softplus(z)) = (1+2u) / (1+2u+2u^2)
        #   z< 0: tanh(softplus(z)) = (u^2+2u) / (u^2+2u+2)
        u = jnp.exp(-jnp.abs(z))
        num = jnp.where(z >= 0.0, 1.0 + 2.0 * u, u * (u + 2.0))
        den = num + jnp.where(z >= 0.0, 2.0 * (u * u), 2.0)
        h = z * num * pl.reciprocal(den, approx=True)
        # Sigmoid gate (stable single-exp form): s = exp(-|g|)
        #   g>=0: 1/(1+s) ;  g<0: s/(1+s)
        g = jnp.dot(h.astype(jnp.bfloat16), gw_ref[i],
                    preferred_element_type=jnp.float32) + gb_ref[i]
        s = jnp.exp(-jnp.abs(g))
        gate = jnp.where(g >= 0.0, 1.0, s) * pl.reciprocal(1.0 + s, approx=True)
        h = h * gate
        # Dropout: identity at inference.
    y = jnp.dot(h.astype(jnp.bfloat16), hw_ref[...],
                preferred_element_type=jnp.float32) + hb_ref[...]
    o_ref[...] = y


def fused_mlp_pallas(x_in, fp):
    """x_in: (batch, d_eff) f32 effective input (unscaled numeric + embeddings)."""
    batch, d_eff = x_in.shape
    n_layers, DP, _ = fp["w"].shape
    CP = fp["hw"].shape[1]

    tile_b = min(_MAX_TILE_B, _round_up(batch, _SUBLANE))
    b_pad = _round_up(batch, tile_b)
    x_pad = jnp.zeros((b_pad, DP), jnp.float32).at[:batch, :d_eff].set(x_in)

    out = pl.pallas_call(
        _fused_mlp_kernel,
        out_shape=jax.ShapeDtypeStruct((b_pad, CP), jnp.float32),
        grid=(b_pad // tile_b,),
        in_specs=[
            pl.BlockSpec((tile_b, DP), lambda i: (i, 0)),                 # x tile
            pl.BlockSpec(fp["w"].shape, lambda i: (0, 0, 0)),             # weights
            pl.BlockSpec(fp["b"].shape, lambda i: (0, 0, 0)),             # biases
            pl.BlockSpec(fp["gw"].shape, lambda i: (0, 0, 0)),            # gate weights
            pl.BlockSpec(fp["gb"].shape, lambda i: (0, 0, 0)),            # gate biases
            pl.BlockSpec(fp["hw"].shape, lambda i: (0, 0)),               # head weight
            pl.BlockSpec(fp["hb"].shape, lambda i: (0, 0)),               # head bias
        ],
        out_specs=pl.BlockSpec((tile_b, CP), lambda i: (i, 0)),
        compiler_params=pltpu.CompilerParams(
            dimension_semantics=("parallel",)),                            # v7x: 2 TCs
    )(x_pad, fp["w"], fp["b"], fp["gw"], fp["gb"], fp["hw"], fp["hb"])
    return out[:batch, :fp["n_classes"]]


# ----------------------------------------------------------------------------
# One-time parameter packing: pad to lane-dense 128 widths, stack layers,
# fold the scale parameter into layer-0 weight rows, cast matmul weights bf16.
# ----------------------------------------------------------------------------
def prepare_fused_params(params, categorical_indicator):
    num_idx = np.where(~categorical_indicator)[0]
    scale_num = params["scale"][num_idx]          # numeric-column scales

    layers = params["layers"]
    n_layers = len(layers)
    d_layers = layers[0][0].shape[1]
    d_eff = layers[0][0].shape[0]                 # effective input width
    n_classes = params["head_w"].shape[1]

    DP = _round_up(max(d_eff, d_layers), _LANE)   # padded hidden/input width
    CP = _round_up(n_classes, _LANE)              # padded output width

    w_s, b_s, gw_s, gb_s = [], [], [], []
    for li, (w, b, gw, gb) in enumerate(layers):
        w_eff = w
        if li == 0:
            # Fold x*scale into the first linear: (x*s) @ W == x @ (diag(s) W).
            # Only numeric rows are scaled; embedding rows are untouched.
            n_num = scale_num.shape[0]
            w_eff = w.at[:n_num, :].multiply(scale_num[:, None])
        w_s.append(jnp.zeros((DP, DP), jnp.float32)
                   .at[:w_eff.shape[0], :d_layers].set(w_eff))
        b_s.append(jnp.zeros((1, DP), jnp.float32).at[:, :d_layers].set(b))
        gw_s.append(jnp.zeros((DP, DP), jnp.float32)
                    .at[:d_layers, :d_layers].set(gw))
        gb_s.append(jnp.zeros((1, DP), jnp.float32).at[:, :d_layers].set(gb))

    fp = {
        "w": jnp.stack(w_s).astype(jnp.bfloat16),     # (L, DP, DP)
        "b": jnp.stack(b_s),                          # (L, 1, DP) f32
        "gw": jnp.stack(gw_s).astype(jnp.bfloat16),   # (L, DP, DP)
        "gb": jnp.stack(gb_s),                        # (L, 1, DP) f32
        "hw": jnp.zeros((DP, CP), jnp.float32)
                 .at[:d_layers, :n_classes].set(params["head_w"])
                 .astype(jnp.bfloat16),               # (DP, CP)
        "hb": jnp.zeros((1, CP), jnp.float32)
                 .at[:, :n_classes].set(params["head_b"]),
        "n_classes": n_classes,
        "d_eff": d_eff,
    }
    return fp


# ----------------------------------------------------------------------------
# EnhancedMLP forward (tiny glue in JAX, everything else fused in Pallas)
# ----------------------------------------------------------------------------
def enhanced_mlp_forward(x, params, categorical_indicator, fused=None):
    if fused is None:
        fused = prepare_fused_params(params, categorical_indicator)

    num_idx = np.where(~categorical_indicator)[0]
    cat_idx = np.where(categorical_indicator)[0]

    # Numeric-column scaling is folded into layer-0 weights inside the kernel;
    # only the categorical column must still be scaled before .long() truncation.
    x_num = x[:, num_idx].astype(jnp.float32)
    if params["emb"] is not None:
        x_cat = (x[:, cat_idx] * params["scale"][cat_idx]).astype(jnp.int32)
        emb = params["emb"][x_cat[:, 0]]              # embedding gather (JAX glue)
        x_in = jnp.concatenate([x_num, emb], axis=1)
    else:
        x_in = x_num

    return fused_mlp_pallas(x_in, fused)


# ----------------------------------------------------------------------------
# Deterministic parameter init (mirrors module __init__ shapes)
# ----------------------------------------------------------------------------
def init_params(key, d_in, n_layers, d_layers, n_classes, categories, d_embedding):
    keys = jax.random.split(key, 4 * n_layers + 4)
    ki = iter(range(len(keys)))

    scale = jnp.ones((d_in,), jnp.float32)

    if categories:
        emb = jax.random.normal(keys[next(ki)], (categories[0], d_embedding),
                                jnp.float32) * np.sqrt(2.0 / d_embedding)
        d_in_eff = d_in - 1 + d_embedding
    else:
        emb = None
        d_in_eff = d_in

    layers = []
    for i in range(n_layers):
        in_dim = d_layers if i > 0 else d_in_eff
        lim = 1.0 / np.sqrt(in_dim)
        w = jax.random.uniform(keys[next(ki)], (in_dim, d_layers), jnp.float32, -lim, lim)
        b = jax.random.uniform(keys[next(ki)], (1, d_layers), jnp.float32, -lim, lim)
        glim = 1.0 / np.sqrt(d_layers)
        gw = jax.random.uniform(keys[next(ki)], (d_layers, d_layers), jnp.float32, -glim, glim)
        gb = jax.random.uniform(keys[next(ki)], (1, d_layers), jnp.float32, -glim, glim)
        layers.append((w, b, gw, gb))

    hlim = 1.0 / np.sqrt(d_layers)
    head_w = jax.random.uniform(keys[next(ki)], (d_layers, n_classes), jnp.float32, -hlim, hlim)
    head_b = jax.random.uniform(keys[next(ki)], (1, n_classes), jnp.float32, -hlim, hlim)

    return {"scale": scale, "emb": emb, "layers": layers,
            "head_w": head_w, "head_b": head_b}


# ----------------------------------------------------------------------------
# Pure-JAX f32 reference (exact PyTorch semantics) for the sanity check
# ----------------------------------------------------------------------------
def reference_forward(x, params, categorical_indicator):
    x = x * params["scale"]
    num_idx = np.where(~categorical_indicator)[0]
    cat_idx = np.where(categorical_indicator)[0]
    x_num = x[:, num_idx].astype(jnp.float32)
    x_cat = x[:, cat_idx].astype(jnp.int32)
    if params["emb"] is not None:
        x = jnp.concatenate([x_num, params["emb"][x_cat[:, 0]]], axis=1)
    else:
        x = x_num
    for (w, b, gw, gb) in params["layers"]:
        h = x @ w + b
        h = h * jnp.tanh(jnp.logaddexp(h, 0.0))          # Mish
        x = h * jax.nn.sigmoid(h @ gw + gb)              # gate
    return x @ params["head_w"] + params["head_b"]


if __name__ == "__main__":
    # Small, module-consistent shapes.
    batch = 16
    d_in = 8
    n_layers = 3
    d_layers = 32
    n_classes = 5
    d_embedding = 4
    categories = [10]
    categorical_indicator = np.zeros(d_in, dtype=bool)
    categorical_indicator[-1] = True                     # last feature categorical

    key = jax.random.PRNGKey(0)
    k_param, k_num, k_cat = jax.random.split(key, 3)

    params = init_params(k_param, d_in, n_layers, d_layers, n_classes,
                         categories, d_embedding)

    x_num = jax.random.normal(k_num, (batch, d_in - 1), jnp.float32)
    x_cat = jax.random.randint(k_cat, (batch, 1), 0, categories[0]).astype(jnp.float32)
    x = jnp.concatenate([x_num, x_cat], axis=1)          # (batch, d_in)

    fused = prepare_fused_params(params, categorical_indicator)
    out = enhanced_mlp_forward(x, params, categorical_indicator, fused)
    out = jax.block_until_ready(out)

    ref = jax.block_until_ready(reference_forward(x, params, categorical_indicator))
    assert out.shape == (batch, n_classes)
    # bf16 MXU operands + approx reciprocals => loosened tolerance vs f32 reference.
    np.testing.assert_allclose(np.asarray(out), np.asarray(ref), rtol=5e-2, atol=5e-2)

    print("KERNEL_OK")
</pallas_src>

<mosaic_0001>
module attributes {stable_mosaic.version = 11 : i64} {
  func.func @_fused_mlp_kernel(%arg0: i32, %arg1: memref<16x128xf32, #tpu.memory_space<vmem>>, %arg2: memref<3x128x128xbf16, #tpu.memory_space<vmem>>, %arg3: memref<3x1x128xf32, #tpu.memory_space<vmem>>, %arg4: memref<3x128x128xbf16, #tpu.memory_space<vmem>>, %arg5: memref<3x1x128xf32, #tpu.memory_space<vmem>>, %arg6: memref<128x128xbf16, #tpu.memory_space<vmem>>, %arg7: memref<1x128xf32, #tpu.memory_space<vmem>>, %arg8: memref<16x128xf32, #tpu.memory_space<vmem>>) attributes {dimension_semantics = [#tpu.dimension_semantics<parallel>], iteration_bounds = array<i64: 1>, scalar_prefetch = 0 : i64, scratch_operands = 0 : i64, tpu.core_type = #tpu.core_type<tc>, window_params = [{transform_indices = @transform_0, window_bounds = array<i64: 16, 128>}, {pipeline_mode = #tpu.pipeline_mode<synchronous>, transform_indices = @transform_1, window_bounds = array<i64: 3, 128, 128>}, {pipeline_mode = #tpu.pipeline_mode<synchronous>, transform_indices = @transform_2, window_bounds = array<i64: 3, 1, 128>}, {pipeline_mode = #tpu.pipeline_mode<synchronous>, transform_indices = @transform_3, window_bounds = array<i64: 3, 128, 128>}, {pipeline_mode = #tpu.pipeline_mode<synchronous>, transform_indices = @transform_4, window_bounds = array<i64: 3, 1, 128>}, {pipeline_mode = #tpu.pipeline_mode<synchronous>, transform_indices = @transform_5, window_bounds = array<i64: 128, 128>}, {pipeline_mode = #tpu.pipeline_mode<synchronous>, transform_indices = @transform_6, window_bounds = array<i64: 1, 128>}, {transform_indices = @transform_7, window_bounds = array<i64: 16, 128>}]} {
    %c0 = arith.constant 0 : index
    %c0_0 = arith.constant 0 : index
    %0 = vector.load %arg1[%c0, %c0_0] : memref<16x128xf32, #tpu.memory_space<vmem>>, vector<16x128xf32>
    %1 = arith.truncf %0 : vector<16x128xf32> to vector<16x128xbf16>
    %c0_1 = arith.constant 0 : index
    %c0_2 = arith.constant 0 : index
    %c0_3 = arith.constant 0 : index
    %2 = vector.load %arg2[%c0_1, %c0_2, %c0_3] : memref<3x128x128xbf16, #tpu.memory_space<vmem>>, vector<1x128x128xbf16>
    %3 = vector.shape_cast %2 : vector<1x128x128xbf16> to vector<128x128xbf16>
    %cst = arith.constant dense<0.000000e+00> : vector<16x128xf32>
    %4 = tpu.matmul %1, %3, %cst {dimension_numbers = #tpu.dot_dimension_numbers<[1], [0], [0], [1], [0, 0, 1, 1], [], []>} : vector<16x128xbf16>, vector<128x128xbf16>, vector<16x128xf32> -> vector<16x128xf32>
    %c0_4 = arith.constant 0 : index
    %c0_5 = arith.constant 0 : index
    %c0_6 = arith.constant 0 : index
    %5 = vector.load %arg3[%c0_4, %c0_5, %c0_6] : memref<3x1x128xf32, #tpu.memory_space<vmem>>, vector<1x1x128xf32>
    %6 = vector.shape_cast %5 : vector<1x1x128xf32> to vector<1x128xf32>
    %7 = vector.broadcast %6 : vector<1x128xf32> to vector<16x128xf32>
    %8 = arith.addf %4, %7 : vector<16x128xf32>
    %9 = math.absf %8 : vector<16x128xf32>
    %cst_7 = arith.constant 0.000000e+00 : f32
    %10 = vector.broadcast %cst_7 : f32 to vector<16x128xf32>
    %11 = arith.subf %10, %9 : vector<16x128xf32>
    %12 = math.exp %11 : vector<16x128xf32>
    %cst_8 = arith.constant 0.000000e+00 : f32
    %13 = vector.broadcast %cst_8 : f32 to vector<16x128xf32>
    %14 = arith.cmpf oge, %8, %13 : vector<16x128xf32>
    %cst_9 = arith.constant 2.000000e+00 : f32
    %15 = vector.broadcast %cst_9 : f32 to vector<16x128xf32>
    %16 = arith.mulf %15, %12 : vector<16x128xf32>
    %cst_10 = arith.constant 1.000000e+00 : f32
    %17 = vector.broadcast %cst_10 : f32 to vector<16x128xf32>
    %18 = arith.addf %17, %16 : vector<16x128xf32>
    %cst_11 = arith.constant 2.000000e+00 : f32
    %19 = vector.broadcast %cst_11 : f32 to vector<16x128xf32>
    %20 = arith.addf %12, %19 : vector<16x128xf32>
    %21 = arith.mulf %12, %20 : vector<16x128xf32>
    %22 = arith.select %14, %18, %21 : vector<16x128xi1>, vector<16x128xf32>
    %cst_12 = arith.constant 0.000000e+00 : f32
    %23 = vector.broadcast %cst_12 : f32 to vector<16x128xf32>
    %24 = arith.cmpf oge, %8, %23 : vector<16x128xf32>
    %25 = arith.mulf %12, %12 : vector<16x128xf32>
    %cst_13 = arith.constant 2.000000e+00 : f32
    %26 = vector.broadcast %cst_13 : f32 to vector<16x128xf32>
    %27 = arith.mulf %26, %25 : vector<16x128xf32>
    %cst_14 = arith.constant 2.000000e+00 : f32
    %28 = vector.broadcast %cst_14 : f32 to vector<16x128xf32>
    %29 = arith.select %24, %27, %28 : vector<16x128xi1>, vector<16x128xf32>
    %30 = arith.addf %22, %29 : vector<16x128xf32>
    %31 = arith.mulf %8, %22 : vector<16x128xf32>
    %32 = tpu.reciprocal %30 {approx = true} : vector<16x128xf32> -> vector<16x128xf32>
    %33 = arith.mulf %31, %32 : vector<16x128xf32>
    %34 = arith.truncf %33 : vector<16x128xf32> to vector<16x128xbf16>
    %c0_15 = arith.constant 0 : index
    %c0_16 = arith.constant 0 : index
    %c0_17 = arith.constant 0 : index
    %35 = vector.load %arg4[%c0_15, %c0_16, %c0_17] : memref<3x128x128xbf16, #tpu.memory_space<vmem>>, vector<1x128x128xbf16>
    %36 = vector.shape_cast %35 : vector<1x128x128xbf16> to vector<128x128xbf16>
    %cst_18 = arith.constant dense<0.000000e+00> : vector<16x128xf32>
    %37 = tpu.matmul %34, %36, %cst_18 {dimension_numbers = #tpu.dot_dimension_numbers<[1], [0], [0], [1], [0, 0, 1, 1], [], []>} : vector<16x128xbf16>, vector<128x128xbf16>, vector<16x128xf32> -> vector<16x128xf32>
    %c0_19 = arith.constant 0 : index
    %c0_20 = arith.constant 0 : index
    %c0_21 = arith.constant 0 : index
    %38 = vector.load %arg5[%c0_19, %c0_20, %c0_21] : memref<3x1x128xf32, #tpu.memory_space<vmem>>, vector<1x1x128xf32>
    %39 = vector.shape_cast %38 : vector<1x1x128xf32> to vector<1x128xf32>
    %40 = vector.broadcast %39 : vector<1x128xf32> to vector<16x128xf32>
    %41 = arith.addf %37, %40 : vector<16x128xf32>
    %42 = math.absf %41 : vector<16x128xf32>
    %cst_22 = arith.constant 0.000000e+00 : f32
    %43 = vector.broadcast %cst_22 : f32 to vector<16x128xf32>
    %44 = arith.subf %43, %42 : vector<16x128xf32>
    %45 = math.exp %44 : vector<16x128xf32>
    %cst_23 = arith.constant 0.000000e+00 : f32
    %46 = vector.broadcast %cst_23 : f32 to vector<16x128xf32>
    %47 = arith.cmpf oge, %41, %46 : vector<16x128xf32>
    %cst_24 = arith.constant 1.000000e+00 : f32
    %48 = vector.broadcast %cst_24 : f32 to vector<16x128xf32>
    %49 = arith.select %47, %48, %45 : vector<16x128xi1>, vector<16x128xf32>
    %cst_25 = arith.constant 1.000000e+00 : f32
    %50 = vector.broadcast %cst_25 : f32 to vector<16x128xf32>
    %51 = arith.addf %50, %45 : vector<16x128xf32>
    %52 = tpu.reciprocal %51 {approx = true} : vector<16x128xf32> -> vector<16x128xf32>
    %53 = arith.mulf %49, %52 : vector<16x128xf32>
    %54 = arith.mulf %33, %53 : vector<16x128xf32>
    %55 = arith.truncf %54 : vector<16x128xf32> to vector<16x128xbf16>
    %c1 = arith.constant 1 : index
    %c0_26 = arith.constant 0 : index
    %c0_27 = arith.constant 0 : index
    %56 = vector.load %arg2[%c1, %c0_26, %c0_27] : memref<3x128x128xbf16, #tpu.memory_space<vmem>>, vector<1x128x128xbf16>
    %57 = vector.shape_cast %56 : vector<1x128x128xbf16> to vector<128x128xbf16>
    %cst_28 = arith.constant dense<0.000000e+00> : vector<16x128xf32>
    %58 = tpu.matmul %55, %57, %cst_28 {dimension_numbers = #tpu.dot_dimension_numbers<[1], [0], [0], [1], [0, 0, 1, 1], [], []>} : vector<16x128xbf16>, vector<128x128xbf16>, vector<16x128xf32> -> vector<16x128xf32>
    %c1_29 = arith.constant 1 : index
    %c0_30 = arith.constant 0 : index
    %c0_31 = arith.constant 0 : index
    %59 = vector.load %arg3[%c1_29, %c0_30, %c0_31] : memref<3x1x128xf32, #tpu.memory_space<vmem>>, vector<1x1x128xf32>
    %60 = vector.shape_cast %59 : vector<1x1x128xf32> to vector<1x128xf32>
    %61 = vector.broadcast %60 : vector<1x128xf32> to vector<16x128xf32>
    %62 = arith.addf %58, %61 : vector<16x128xf32>
    %63 = math.absf %62 : vector<16x128xf32>
    %cst_32 = arith.constant 0.000000e+00 : f32
    %64 = vector.broadcast %cst_32 : f32 to vector<16x128xf32>
    %65 = arith.subf %64, %63 : vector<16x128xf32>
    %66 = math.exp %65 : vector<16x128xf32>
    %cst_33 = arith.constant 0.000000e+00 : f32
    %67 = vector.broadcast %cst_33 : f32 to vector<16x128xf32>
    %68 = arith.cmpf oge, %62, %67 : vector<16x128xf32>
    %cst_34 = arith.constant 2.000000e+00 : f32
    %69 = vector.broadcast %cst_34 : f32 to vector<16x128xf32>
    %70 = arith.mulf %69, %66 : vector<16x128xf32>
    %cst_35 = arith.constant 1.000000e+00 : f32
    %71 = vector.broadcast %cst_35 : f32 to vector<16x128xf32>
    %72 = arith.addf %71, %70 : vector<16x128xf32>
    %cst_36 = arith.constant 2.000000e+00 : f32
    %73 = vector.broadcast %cst_36 : f32 to vector<16x128xf32>
    %74 = arith.addf %66, %73 : vector<16x128xf32>
    %75 = arith.mulf %66, %74 : vector<16x128xf32>
    %76 = arith.select %68, %72, %75 : vector<16x128xi1>, vector<16x128xf32>
    %cst_37 = arith.constant 0.000000e+00 : f32
    %77 = vector.broadcast %cst_37 : f32 to vector<16x128xf32>
    %78 = arith.cmpf oge, %62, %77 : vector<16x128xf32>
    %79 = arith.mulf %66, %66 : vector<16x128xf32>
    %cst_38 = arith.constant 2.000000e+00 : f32
    %80 = vector.broadcast %cst_38 : f32 to vector<16x128xf32>
    %81 = arith.mulf %80, %79 : vector<16x128xf32>
    %cst_39 = arith.constant 2.000000e+00 : f32
    %82 = vector.broadcast %cst_39 : f32 to vector<16x128xf32>
    %83 = arith.select %78, %81, %82 : vector<16x128xi1>, vector<16x128xf32>
    %84 = arith.addf %76, %83 : vector<16x128xf32>
    %85 = arith.mulf %62, %76 : vector<16x128xf32>
    %86 = tpu.reciprocal %84 {approx = true} : vector<16x128xf32> -> vector<16x128xf32>
    %87 = arith.mulf %85, %86 : vector<16x128xf32>
    %88 = arith.truncf %87 : vector<16x128xf32> to vector<16x128xbf16>
    %c1_40 = arith.constant 1 : index
    %c0_41 = arith.constant 0 : index
    %c0_42 = arith.constant 0 : index
    %89 = vector.load %arg4[%c1_40, %c0_41, %c0_42] : memref<3x128x128xbf16, #tpu.memory_space<vmem>>, vector<1x128x128xbf16>
    %90 = vector.shape_cast %89 : vector<1x128x128xbf16> to vector<128x128xbf16>
    %cst_43 = arith.constant dense<0.000000e+00> : vector<16x128xf32>
    %91 = tpu.matmul %88, %90, %cst_43 {dimension_numbers = #tpu.dot_dimension_numbers<[1], [0], [0], [1], [0, 0, 1, 1], [], []>} : vector<16x128xbf16>, vector<128x128xbf16>, vector<16x128xf32> -> vector<16x128xf32>
    %c1_44 = arith.constant 1 : index
    %c0_45 = arith.constant 0 : index
    %c0_46 = arith.constant 0 : index
    %92 = vector.load %arg5[%c1_44, %c0_45, %c0_46] : memref<3x1x128xf32, #tpu.memory_space<vmem>>, vector<1x1x128xf32>
    %93 = vector.shape_cast %92 : vector<1x1x128xf32> to vector<1x128xf32>
    %94 = vector.broadcast %93 : vector<1x128xf32> to vector<16x128xf32>
    %95 = arith.addf %91, %94 : vector<16x128xf32>
    %96 = math.absf %95 : vector<16x128xf32>
    %cst_47 = arith.constant 0.000000e+00 : f32
    %97 = vector.broadcast %cst_47 : f32 to vector<16x128xf32>
    %98 = arith.subf %97, %96 : vector<16x128xf32>
    %99 = math.exp %98 : vector<16x128xf32>
    %cst_48 = arith.constant 0.000000e+00 : f32
    %100 = vector.broadcast %cst_48 : f32 to vector<16x128xf32>
    %101 = arith.cmpf oge, %95, %100 : vector<16x128xf32>
    %cst_49 = arith.constant 1.000000e+00 : f32
    %102 = vector.broadcast %cst_49 : f32 to vector<16x128xf32>
    %103 = arith.select %101, %102, %99 : vector<16x128xi1>, vector<16x128xf32>
    %cst_50 = arith.constant 1.000000e+00 : f32
    %104 = vector.broadcast %cst_50 : f32 to vector<16x128xf32>
    %105 = arith.addf %104, %99 : vector<16x128xf32>
    %106 = tpu.reciprocal %105 {approx = true} : vector<16x128xf32> -> vector<16x128xf32>
    %107 = arith.mulf %103, %106 : vector<16x128xf32>
    %108 = arith.mulf %87, %107 : vector<16x128xf32>
    %109 = arith.truncf %108 : vector<16x128xf32> to vector<16x128xbf16>
    %c2 = arith.constant 2 : index
    %c0_51 = arith.constant 0 : index
    %c0_52 = arith.constant 0 : index
    %110 = vector.load %arg2[%c2, %c0_51, %c0_52] : memref<3x128x128xbf16, #tpu.memory_space<vmem>>, vector<1x128x128xbf16>
    %111 = vector.shape_cast %110 : vector<1x128x128xbf16> to vector<128x128xbf16>
    %cst_53 = arith.constant dense<0.000000e+00> : vector<16x128xf32>
    %112 = tpu.matmul %109, %111, %cst_53 {dimension_numbers = #tpu.dot_dimension_numbers<[1], [0], [0], [1], [0, 0, 1, 1], [], []>} : vector<16x128xbf16>, vector<128x128xbf16>, vector<16x128xf32> -> vector<16x128xf32>
    %c2_54 = arith.constant 2 : index
    %c0_55 = arith.constant 0 : index
    %c0_56 = arith.constant 0 : index
    %113 = vector.load %arg3[%c2_54, %c0_55, %c0_56] : memref<3x1x128xf32, #tpu.memory_space<vmem>>, vector<1x1x128xf32>
    %114 = vector.shape_cast %113 : vector<1x1x128xf32> to vector<1x128xf32>
    %115 = vector.broadcast %114 : vector<1x128xf32> to vector<16x128xf32>
    %116 = arith.addf %112, %115 : vector<16x128xf32>
    %117 = math.absf %116 : vector<16x128xf32>
    %cst_57 = arith.constant 0.000000e+00 : f32
    %118 = vector.broadcast %cst_57 : f32 to vector<16x128xf32>
    %119 = arith.subf %118, %117 : vector<16x128xf32>
    %120 = math.exp %119 : vector<16x128xf32>
    %cst_58 = arith.constant 0.000000e+00 : f32
    %121 = vector.broadcast %cst_58 : f32 to vector<16x128xf32>
    %122 = arith.cmpf oge, %116, %121 : vector<16x128xf32>
    %cst_59 = arith.constant 2.000000e+00 : f32
    %123 = vector.broadcast %cst_59 : f32 to vector<16x128xf32>
    %124 = arith.mulf %123, %120 : vector<16x128xf32>
    %cst_60 = arith.constant 1.000000e+00 : f32
    %125 = vector.broadcast %cst_60 : f32 to vector<16x128xf32>
    %126 = arith.addf %125, %124 : vector<16x128xf32>
    %cst_61 = arith.constant 2.000000e+00 : f32
    %127 = vector.broadcast %cst_61 : f32 to vector<16x128xf32>
    %128 = arith.addf %120, %127 : vector<16x128xf32>
    %129 = arith.mulf %120, %128 : vector<16x128xf32>
    %130 = arith.select %122, %126, %129 : vector<16x128xi1>, vector<16x128xf32>
    %cst_62 = arith.constant 0.000000e+00 : f32
    %131 = vector.broadcast %cst_62 : f32 to vector<16x128xf32>
    %132 = arith.cmpf oge, %116, %131 : vector<16x128xf32>
    %133 = arith.mulf %120, %120 : vector<16x128xf32>
    %cst_63 = arith.constant 2.000000e+00 : f32
    %134 = vector.broadcast %cst_63 : f32 to vector<16x128xf32>
    %135 = arith.mulf %134, %133 : vector<16x128xf32>
    %cst_64 = arith.constant 2.000000e+00 : f32
    %136 = vector.broadcast %cst_64 : f32 to vector<16x128xf32>
    %137 = arith.select %132, %135, %136 : vector<16x128xi1>, vector<16x128xf32>
    %138 = arith.addf %130, %137 : vector<16x128xf32>
    %139 = arith.mulf %116, %130 : vector<16x128xf32>
    %140 = tpu.reciprocal %138 {approx = true} : vector<16x128xf32> -> vector<16x128xf32>
    %141 = arith.mulf %139, %140 : vector<16x128xf32>
    %142 = arith.truncf %141 : vector<16x128xf32> to vector<16x128xbf16>
    %c2_65 = arith.constant 2 : index
    %c0_66 = arith.constant 0 : index
    %c0_67 = arith.constant 0 : index
    %143 = vector.load %arg4[%c2_65, %c0_66, %c0_67] : memref<3x128x128xbf16, #tpu.memory_space<vmem>>, vector<1x128x128xbf16>
    %144 = vector.shape_cast %143 : vector<1x128x128xbf16> to vector<128x128xbf16>
    %cst_68 = arith.constant dense<0.000000e+00> : vector<16x128xf32>
    %145 = tpu.matmul %142, %144, %cst_68 {dimension_numbers = #tpu.dot_dimension_numbers<[1], [0], [0], [1], [0, 0, 1, 1], [], []>} : vector<16x128xbf16>, vector<128x128xbf16>, vector<16x128xf32> -> vector<16x128xf32>
    %c2_69 = arith.constant 2 : index
    %c0_70 = arith.constant 0 : index
    %c0_71 = arith.constant 0 : index
    %146 = vector.load %arg5[%c2_69, %c0_70, %c0_71] : memref<3x1x128xf32, #tpu.memory_space<vmem>>, vector<1x1x128xf32>
    %147 = vector.shape_cast %146 : vector<1x1x128xf32> to vector<1x128xf32>
    %148 = vector.broadcast %147 : vector<1x128xf32> to vector<16x128xf32>
    %149 = arith.addf %145, %148 : vector<16x128xf32>
    %150 = math.absf %149 : vector<16x128xf32>
    %cst_72 = arith.constant 0.000000e+00 : f32
    %151 = vector.broadcast %cst_72 : f32 to vector<16x128xf32>
    %152 = arith.subf %151, %150 : vector<16x128xf32>
    %153 = math.exp %152 : vector<16x128xf32>
    %cst_73 = arith.constant 0.000000e+00 : f32
    %154 = vector.broadcast %cst_73 : f32 to vector<16x128xf32>
    %155 = arith.cmpf oge, %149, %154 : vector<16x128xf32>
    %cst_74 = arith.constant 1.000000e+00 : f32
    %156 = vector.broadcast %cst_74 : f32 to vector<16x128xf32>
    %157 = arith.select %155, %156, %153 : vector<16x128xi1>, vector<16x128xf32>
    %cst_75 = arith.constant 1.000000e+00 : f32
    %158 = vector.broadcast %cst_75 : f32 to vector<16x128xf32>
    %159 = arith.addf %158, %153 : vector<16x128xf32>
    %160 = tpu.reciprocal %159 {approx = true} : vector<16x128xf32> -> vector<16x128xf32>
    %161 = arith.mulf %157, %160 : vector<16x128xf32>
    %162 = arith.mulf %141, %161 : vector<16x128xf32>
    %163 = arith.truncf %162 : vector<16x128xf32> to vector<16x128xbf16>
    %c0_76 = arith.constant 0 : index
    %c0_77 = arith.constant 0 : index
    %164 = vector.load %arg6[%c0_76, %c0_77] : memref<128x128xbf16, #tpu.memory_space<vmem>>, vector<128x128xbf16>
    %cst_78 = arith.constant dense<0.000000e+00> : vector<16x128xf32>
    %165 = tpu.matmul %163, %164, %cst_78 {dimension_numbers = #tpu.dot_dimension_numbers<[1], [0], [0], [1], [0, 0, 1, 1], [], []>} : vector<16x128xbf16>, vector<128x128xbf16>, vector<16x128xf32> -> vector<16x128xf32>
    %c0_79 = arith.constant 0 : index
    %c0_80 = arith.constant 0 : index
    %166 = vector.load %arg7[%c0_79, %c0_80] : memref<1x128xf32, #tpu.memory_space<vmem>>, vector<1x128xf32>
    %167 = vector.broadcast %166 : vector<1x128xf32> to vector<16x128xf32>
    %168 = arith.addf %165, %167 : vector<16x128xf32>
    %c0_81 = arith.constant 0 : index
    %c0_82 = arith.constant 0 : index
    %169 = vector.load %arg8[%c0_81, %c0_82] : memref<16x128xf32, #tpu.memory_space<vmem>>, vector<16x128xf32>
    tpu.vector_store %arg8[%c0_81, %c0_82], %168 {strides = array<i32>} : memref<16x128xf32, #tpu.memory_space<vmem>>, vector<16x128xf32>,
    return
  }
  func.func @transform_0(%arg0: i32) -> (i32, i32) {
    %c0_i32 = arith.constant 0 : i32
    %c0_i32_0 = arith.constant 0 : i32
    return %arg0, %c0_i32 : i32, i32
  }
  func.func @transform_1(%arg0: i32) -> (i32, i32, i32) {
    %c0_i32 = arith.constant 0 : i32
    %c0_i32_0 = arith.constant 0 : i32
    %c0_i32_1 = arith.constant 0 : i32
    %c0_i32_2 = arith.constant 0 : i32
    return %c0_i32, %c0_i32_0, %c0_i32_1 : i32, i32, i32
  }
  func.func @transform_2(%arg0: i32) -> (i32, i32, i32) {
    %c0_i32 = arith.constant 0 : i32
    %c0_i32_0 = arith.constant 0 : i32
    %c0_i32_1 = arith.constant 0 : i32
    %c0_i32_2 = arith.constant 0 : i32
    return %c0_i32, %c0_i32_0, %c0_i32_1 : i32, i32, i32
  }
  func.func @transform_3(%arg0: i32) -> (i32, i32, i32) {
    %c0_i32 = arith.constant 0 : i32
    %c0_i32_0 = arith.constant 0 : i32
    %c0_i32_1 = arith.constant 0 : i32
    %c0_i32_2 = arith.constant 0 : i32
    return %c0_i32, %c0_i32_0, %c0_i32_1 : i32, i32, i32
  }
  func.func @transform_4(%arg0: i32) -> (i32, i32, i32) {
    %c0_i32 = arith.constant 0 : i32
    %c0_i32_0 = arith.constant 0 : i32
    %c0_i32_1 = arith.constant 0 : i32
    %c0_i32_2 = arith.constant 0 : i32
    return %c0_i32, %c0_i32_0, %c0_i32_1 : i32, i32, i32
  }
  func.func @transform_5(%arg0: i32) -> (i32, i32) {
    %c0_i32 = arith.constant 0 : i32
    %c0_i32_0 = arith.constant 0 : i32
    %c0_i32_1 = arith.constant 0 : i32
    return %c0_i32, %c0_i32_0 : i32, i32
  }
  func.func @transform_6(%arg0: i32) -> (i32, i32) {
    %c0_i32 = arith.constant 0 : i32
    %c0_i32_0 = arith.constant 0 : i32
    %c0_i32_1 = arith.constant 0 : i32
    return %c0_i32, %c0_i32_0 : i32, i32
  }
  func.func @transform_7(%arg0: i32) -> (i32, i32) {
    %c0_i32 = arith.constant 0 : i32
    %c0_i32_0 = arith.constant 0 : i32
    return %arg0, %c0_i32 : i32, i32
  }
}

</mosaic_0001>

<llo_original>
// kernel: tpu_custom_call.1
$region0: #{tpu_custom_call.1}
  #allocation0 [shape = 'u32[]', space=smem, size = 0x4, offset = 0x4, fixed_abs, tag = 'smem constant byte address 0x4 - core index']
  #allocation1 [shape = 'u32[144,128]{1,0:T(1,128)}', space=vmem, size = 0x12000, scoped, tag = 'internal scratch']
  %s0 = inlined_call_operand.hbm [shape: f32[16,128], index: 0, kind: input, shape index: {}]
  %s1 = inlined_call_operand.hbm [shape: bf16[3,128,128], index: 1, kind: input, shape index: {}]
  %s2 = inlined_call_operand.vmem [shape: f32[3,1,128], index: 2, kind: input, shape index: {}]
  %s3 = inlined_call_operand.hbm [shape: bf16[3,128,128], index: 3, kind: input, shape index: {}]
  %s4 = inlined_call_operand.vmem [shape: f32[3,1,128], index: 4, kind: input, shape index: {}]
  %s5 = inlined_call_operand.hbm [shape: bf16[128,128], index: 5, kind: input, shape index: {}]
  %s6 = inlined_call_operand.vmem [shape: f32[1,128], index: 6, kind: input, shape index: {}]
  %s7 = inlined_call_operand.hbm [shape: f32[16,128], index: 7, kind: output, shape index: {}]
  %s8 = sld [smem:[#allocation0]]
  $region54: #{tpu_custom_call.1} parent=0
    _
  %s10 = ssub.s32 1, %s8
  %s11 = scalar_select 0, %s10, %s8
  $region1: #{tpu_custom_call.1} parent=0
    #allocation2 [shape = 'u8[8192]{0}', space=vmem, size = 0x2000, scoped, tag = 'input window, operand 0, single buffered']
    #allocation3 [shape = 's32[1]{0}', space=sflag, size = 0x4, scoped, tag = 'scoped memory for tpu_custom_call.1']
    #allocation4 [shape = 's32[1]{0}', space=sflag, size = 0x4, scoped, tag = 'scoped memory for tpu_custom_call.1']
    #allocation5 [shape = 'u8[98304]{0}', space=vmem, size = 0x18000, scoped, tag = 'input window, operand 1, single buffered']
    #allocation6 [shape = 's32[1]{0}', space=sflag, size = 0x4, scoped, tag = 'scoped memory for tpu_custom_call.1']
    #allocation7 [shape = 'u8[98304]{0}', space=vmem, size = 0x18000, scoped, tag = 'input window, operand 3, single buffered']
    #allocation8 [shape = 'u8[32768]{0}', space=vmem, size = 0x8000, scoped, tag = 'input window, operand 5, single buffered']
    #allocation9 [shape = 's32[1]{0}', space=sflag, size = 0x4, scoped, tag = 'scoped memory for tpu_custom_call.1']
    #allocation10 [shape = 'u8[8192]{0}', space=vmem, size = 0x2000, scoped, tag = 'output window, operand 0, single buffered']
    %12 = vsyncpa [#allocation3], 0
    %13 = vsyncpa [#allocation6], 0
    %14 = vsyncpa [#allocation9], 0
    %15 = vsyncpa [#allocation4], 0
    // Predicated region
    $region2: #{tpu_custom_call.1} parent=1 // pred_check
      _
    $region3: #{tpu_custom_call.1} parent=1 // pred_check_branch
      %17 = sbr.rel (0) target = $region5
    $region4: #{tpu_custom_call.1} parent=1 // pred_region
      %s19 = ssub.s32 256, 256
      %20 = vsyncadd [#allocation3], %s19
      %s21 = sshll.u32 [#allocation2], 4
      %s22 = int_to_ptr.vmem [resolvable:$true] %s21
      %27 = dma.hbm_to_vmem [thread:$0]  %s0, 256, %s22, [#allocation3], 128, 128, 8
    $region5: #{tpu_custom_call.1} parent=1 // pred_fallthru
      _
    // Predicated region
    $region6: #{tpu_custom_call.1} parent=1 // pred_check
      _
    $region7: #{tpu_custom_call.1} parent=1 // pred_check_branch
      %29 = sbr.rel (0) target = $region9
    $region8: #{tpu_custom_call.1} parent=1 // pred_region
      %s31 = ssub.s32 3072, 3072
      %32 = vsyncadd [#allocation6], %s31
      %s33 = sshll.u32 [#allocation5], 4
      %s34 = int_to_ptr.vmem [resolvable:$true] %s33
      %39 = dma.hbm_to_vmem [thread:$0]  %s1, 3072, %s34, [#allocation6], 64, 64, 4
    $region9: #{tpu_custom_call.1} parent=1 // pred_fallthru
      _
    // Predicated region
    $region10: #{tpu_custom_call.1} parent=1 // pred_check
      _
    $region11: #{tpu_custom_call.1} parent=1 // pred_check_branch
      %41 = sbr.rel (0) target = $region13
    $region12: #{tpu_custom_call.1} parent=1 // pred_region
      _
    $region13: #{tpu_custom_call.1} parent=1 // pred_fallthru
      _
    // Predicated region
    $region14: #{tpu_custom_call.1} parent=1 // pred_check
      _
    $region15: #{tpu_custom_call.1} parent=1 // pred_check_branch
      %43 = sbr.rel (0) target = $region17
    $region16: #{tpu_custom_call.1} parent=1 // pred_region
      %s45 = ssub.s32 3072, 3072
      %46 = vsyncadd [#allocation6], %s45
      %s47 = sshll.u32 [#allocation7], 4
      %s48 = int_to_ptr.vmem [resolvable:$true] %s47
      %53 = dma.hbm_to_vmem [thread:$0]  %s3, 3072, %s48, [#allocation6], 64, 64, 4
    $region17: #{tpu_custom_call.1} parent=1 // pred_fallthru
      _
    // Predicated region
    $region18: #{tpu_custom_call.1} parent=1 // pred_check
      _
    $region19: #{tpu_custom_call.1} parent=1 // pred_check_branch
      %55 = sbr.rel (0) target = $region21
    $region20: #{tpu_custom_call.1} parent=1 // pred_region
      _
    $region21: #{tpu_custom_call.1} parent=1 // pred_fallthru
      _
    // Predicated region
    $region22: #{tpu_custom_call.1} parent=1 // pred_check
      _
    $region23: #{tpu_custom_call.1} parent=1 // pred_check_branch
      %57 = sbr.rel (0) target = $region25
    $region24: #{tpu_custom_call.1} parent=1 // pred_region
      %s59 = ssub.s32 1024, 1024
      %60 = vsyncadd [#allocation9], %s59
      %s61 = sshll.u32 [#allocation8], 4
      %s62 = int_to_ptr.vmem [resolvable:$true] %s61
      %67 = dma.hbm_to_vmem [thread:$0]  %s5, 1024, %s62, [#allocation9], 64, 64, 4
    $region25: #{tpu_custom_call.1} parent=1 // pred_fallthru
      _
    // Predicated region
    $region26: #{tpu_custom_call.1} parent=1 // pred_check
      _
    $region27: #{tpu_custom_call.1} parent=1 // pred_check_branch
      %69 = sbr.rel (0) target = $region29
    $region28: #{tpu_custom_call.1} parent=1 // pred_region
      _
    $region29: #{tpu_custom_call.1} parent=1 // pred_fallthru
      _
    // Predicated region
    $region30: #{tpu_custom_call.1} parent=1 // pred_check
      _
    $region31: #{tpu_custom_call.1} parent=1 // pred_check_branch
      %71 = sbr.rel (0) target = $region33
    $region32: #{tpu_custom_call.1} parent=1 // pred_region
      %72 = dma.done [#allocation3], 256
    $region33: #{tpu_custom_call.1} parent=1 // pred_fallthru
      _
    // Predicated region
    $region34: #{tpu_custom_call.1} parent=1 // pred_check
      _
    $region35: #{tpu_custom_call.1} parent=1 // pred_check_branch
      %74 = sbr.rel (0) target = $region37
    $region36: #{tpu_custom_call.1} parent=1 // pred_region
      %75 = dma.done [#allocation6], 3072
    $region37: #{tpu_custom_call.1} parent=1 // pred_fallthru
      _
    // Predicated region
    $region38: #{tpu_custom_call.1} parent=1 // pred_check
      _
    $region39: #{tpu_custom_call.1} parent=1 // pred_check_branch
      %77 = sbr.rel (0) target = $region41
    $region40: #{tpu_custom_call.1} parent=1 // pred_region
      %78 = dma.done [#allocation6], 3072
    $region41: #{tpu_custom_call.1} parent=1 // pred_fallthru
      _
    // Predicated region
    $region42: #{tpu_custom_call.1} parent=1 // pred_check
      _
    $region43: #{tpu_custom_call.1} parent=1 // pred_check_branch
      %80 = sbr.rel (0) target = $region45
    $region44: #{tpu_custom_call.1} parent=1 // pred_region
      %81 = dma.done [#allocation9], 1024
    $region45: #{tpu_custom_call.1} parent=1 // pred_fallthru
      _
    %v83 = vld [vmem:[#allocation2] sm:$0xff]
    %v84 = vld [vmem:[#allocation2 + $0x8] sm:$0xff]
    %v85 = vpack.c.bf16 %v84, %v83
    %v86 = vld [vmem:[#allocation5] sm:$0xf]
    %v87 = vld [vmem:[#allocation5 + $0x4] sm:$0xf]
    %v88 = vld [vmem:[#allocation5 + $0x8] sm:$0xf]
    %v89 = vld [vmem:[#allocation5 + $0xc] sm:$0xf]
    %v90 = vld [vmem:[#allocation5 + $0x10] sm:$0xf]
    %v91 = vld [vmem:[#allocation5 + $0x14] sm:$0xf]
    %v92 = vld [vmem:[#allocation5 + $0x18] sm:$0xf]
    %v93 = vld [vmem:[#allocation5 + $0x1c] sm:$0xf]
    %v94 = vld [vmem:[#allocation5 + $0x20] sm:$0xf]
    %v95 = vld [vmem:[#allocation5 + $0x24] sm:$0xf]
    %v96 = vld [vmem:[#allocation5 + $0x28] sm:$0xf]
    %v97 = vld [vmem:[#allocation5 + $0x2c] sm:$0xf]
    %v98 = vld [vmem:[#allocation5 + $0x30] sm:$0xf]
    %v99 = vld [vmem:[#allocation5 + $0x34] sm:$0xf]
    %v100 = vld [vmem:[#allocation5 + $0x38] sm:$0xf]
    %v101 = vld [vmem:[#allocation5 + $0x3c] sm:$0xf]
    %v102 = vld [vmem:[%s2] sm:$0x1]
    %v104 = vlaneseq
    %v105 = vshrl.u32 %v104, 7
    %v106 = vsub.s32 0, %v105
    %v107 = vrot.slane %v102, %v106
    %v125 = vunpack.c.l.b16 %v86
    %v126 = vunpack.c.l.b16 %v87
    %v127 = vunpack.c.l.b16 %v88
    %v128 = vunpack.c.l.b16 %v89
    %v129 = vunpack.c.l.b16 %v90
    %v130 = vunpack.c.l.b16 %v91
    %v131 = vunpack.c.l.b16 %v92
    %v132 = vunpack.c.l.b16 %v93
    %v133 = vunpack.c.l.b16 %v94
    %v134 = vunpack.c.l.b16 %v95
    %v135 = vunpack.c.l.b16 %v96
    %v136 = vunpack.c.l.b16 %v97
    %v137 = vunpack.c.l.b16 %v98
    %v138 = vunpack.c.l.b16 %v99
    %v139 = vunpack.c.l.b16 %v100
    %v140 = vunpack.c.l.b16 %v101
    %v141 = vpack.c.b16 %v126, %v125
    %v142 = vpack.c.b16 %v128, %v127
    %v143 = vpack.c.b16 %v130, %v129
    %v144 = vpack.c.b16 %v132, %v131
    %v145 = vpack.c.b16 %v134, %v133
    %v146 = vpack.c.b16 %v136, %v135
    %v147 = vpack.c.b16 %v138, %v137
    %v148 = vpack.c.b16 %v140, %v139
    %157 = vmatprep.subr.bf16.mxu0 0
    %158 = vmatpush1.bf16.msra.mxu0 %v141
    %159 = vmatprep.subr.bf16.mxu0 0
    %160 = vmatpush1.bf16.msra.mxu0 %v142
    %161 = vmatprep.subr.bf16.mxu0 0
    %162 = vmatpush1.bf16.msra.mxu0 %v143
    %163 = vmatprep.subr.bf16.mxu0 0
    %164 = vmatpush1.bf16.msra.mxu0 %v144
    %165 = vmatprep.subr.bf16.mxu0 0
    %166 = vmatpush1.bf16.msra.mxu0 %v145
    %167 = vmatprep.subr.bf16.mxu0 0
    %168 = vmatpush1.bf16.msra.mxu0 %v146
    %169 = vmatprep.subr.bf16.mxu0 0
    %170 = vmatpush1.bf16.msra.mxu0 %v147
    %171 = vmatprep.subr.bf16.mxu0 0
    %172 = vmatpush1.bf16.msra.mxu0 %v148
    %173 = vmatprep.subr.bf16.mxu0 0
    %174 = vmatpush1.bf16.msra.mxu0 0
    %175 = vmatprep.subr.bf16.mxu0 0
    %176 = vmatpush1.bf16.msra.mxu0 0
    %177 = vmatprep.subr.bf16.mxu0 0
    %178 = vmatpush1.bf16.msra.mxu0 0
    %179 = vmatprep.subr.bf16.mxu0 0
    %180 = vmatpush1.bf16.msra.mxu0 0
    %181 = vmatprep.subr.bf16.mxu0 0
    %182 = vmatpush1.bf16.msra.mxu0 0
    %183 = vmatprep.subr.bf16.mxu0 0
    %184 = vmatpush1.bf16.msra.mxu0 0
    %185 = vmatprep.subr.bf16.mxu0 0
    %186 = vmatpush1.bf16.msra.mxu0 0
    %187 = vmatprep.subr.bf16.mxu0 0
    %188 = vmatpush1.bf16.msra.mxu0 0
    %189 = vmatprep.mubr.bf16.mxu0 0
    %190 = vmatmul.mubr.bf16.gmra.mrb[0].mxu0 %v85
    %v191 = vpop.f32.mrb[0].mxu0
    %v192 = vadd.f32 %v107, %v191
    %v193 = vpop.f32.mrb[0].mxu0
    %v194 = vpop.f32.mrb[0].mxu0
    %v195 = vadd.f32 %v107, %v194
    %v196 = vpop.f32.mrb[0].mxu0
    %197 = vdwg.mxu0
    %v198 = vand.u32 2147483647, %v192
    %v199 = vand.u32 2147483647, %v195
    %v200 = vsub.f32 0.0, %v198
    %v201 = vsub.f32 0.0, %v199
    %v202 = vmul.f32 %v200, 1.442695
    %v203 = vpow.pop %v202
    %v204 = vmul.f32 %v201, 1.442695
    %v205 = vpow.pop %v204
    %vm206 = vcmp.ge.f32.partialorder %v192, 0.0
    %vm207 = vcmp.ge.f32.partialorder %v195, 0.0
    %v208 = vmul.f32 %v203, 2.0
    %v209 = vmul.f32 %v205, 2.0
    %v210 = vadd.f32 %v208, 1.0
    %v211 = vadd.f32 %v209, 1.0
    %v212 = vadd.f32 %v203, 2.0
    %v213 = vadd.f32 %v205, 2.0
    %v214 = vmul.f32 %v203, %v212
    %v215 = vmul.f32 %v205, %v213
    %v216 = vsel %vm206, %v210, %v214
    %v217 = vsel %vm207, %v211, %v215
    %v218 = vmul.f32 %v203, %v203
    %v219 = vmul.f32 %v205, %v205
    %v220 = vmul.f32 %v218, 2.0
    %v221 = vmul.f32 %v219, 2.0
    %v222 = vsel %vm206, %v220, 2.0
    %v223 = vsel %vm207, %v221, 2.0
    %v224 = vadd.f32 %v216, %v222
    %v225 = vadd.f32 %v217, %v223
    %v226 = vmul.f32 %v192, %v216
    %v227 = vmul.f32 %v195, %v217
    %v228 = vrcp.pop %v224
    %v229 = vrcp.pop %v225
    %v230 = vmul.f32 %v226, %v228
    %v231 = vmul.f32 %v227, %v229
    %v232 = vpack.c.bf16 %v231, %v230
    %v233 = vld [vmem:[#allocation7] sm:$0xf]
    %v234 = vld [vmem:[#allocation7 + $0x4] sm:$0xf]
    %v235 = vld [vmem:[#allocation7 + $0x8] sm:$0xf]
    %v236 = vld [vmem:[#allocation7 + $0xc] sm:$0xf]
    %v237 = vld [vmem:[#allocation7 + $0x10] sm:$0xf]
    %v238 = vld [vmem:[#allocation7 + $0x14] sm:$0xf]
    %v239 = vld [vmem:[#allocation7 + $0x18] sm:$0xf]
    %v240 = vld [vmem:[#allocation7 + $0x1c] sm:$0xf]
    %v241 = vld [vmem:[#allocation7 + $0x20] sm:$0xf]
    %v242 = vld [vmem:[#allocation7 + $0x24] sm:$0xf]
    %v243 = vld [vmem:[#allocation7 + $0x28] sm:$0xf]
    %v244 = vld [vmem:[#allocation7 + $0x2c] sm:$0xf]
    %v245 = vld [vmem:[#allocation7 + $0x30] sm:$0xf]
    %v246 = vld [vmem:[#allocation7 + $0x34] sm:$0xf]
    %v247 = vld [vmem:[#allocation7 + $0x38] sm:$0xf]
    %v248 = vld [vmem:[#allocation7 + $0x3c] sm:$0xf]
    %v249 = vld [vmem:[%s4] sm:$0x1]
    %v251 = vlaneseq
    %v252 = vshrl.u32 %v251, 7
    %v253 = vsub.s32 0, %v252
    %v254 = vrot.slane %v249, %v253
    %v272 = vunpack.c.l.b16 %v233
    %v273 = vunpack.c.l.b16 %v234
    %v274 = vunpack.c.l.b16 %v235
    %v275 = vunpack.c.l.b16 %v236
    %v276 = vunpack.c.l.b16 %v237
    %v277 = vunpack.c.l.b16 %v238
    %v278 = vunpack.c.l.b16 %v239
    %v279 = vunpack.c.l.b16 %v240
    %v280 = vunpack.c.l.b16 %v241
    %v281 = vunpack.c.l.b16 %v242
    %v282 = vunpack.c.l.b16 %v243
    %v283 = vunpack.c.l.b16 %v244
    %v284 = vunpack.c.l.b16 %v245
    %v285 = vunpack.c.l.b16 %v246
    %v286 = vunpack.c.l.b16 %v247
    %v287 = vunpack.c.l.b16 %v248
    %v288 = vpack.c.b16 %v273, %v272
    %v289 = vpack.c.b16 %v275, %v274
    %v290 = vpack.c.b16 %v277, %v276
    %v291 = vpack.c.b16 %v279, %v278
    %v292 = vpack.c.b16 %v281, %v280
    %v293 = vpack.c.b16 %v283, %v282
    %v294 = vpack.c.b16 %v285, %v284
    %v295 = vpack.c.b16 %v287, %v286
    %304 = vmatprep.subr.bf16.mxu0 0
    %305 = vmatpush1.bf16.msra.mxu0 %v288
    %306 = vmatprep.subr.bf16.mxu0 0
    %307 = vmatpush1.bf16.msra.mxu0 %v289
    %308 = vmatprep.subr.bf16.mxu0 0
    %309 = vmatpush1.bf16.msra.mxu0 %v290
    %310 = vmatprep.subr.bf16.mxu0 0
    %311 = vmatpush1.bf16.msra.mxu0 %v291
    %312 = vmatprep.subr.bf16.mxu0 0
    %313 = vmatpush1.bf16.msra.mxu0 %v292
    %314 = vmatprep.subr.bf16.mxu0 0
    %315 = vmatpush1.bf16.msra.mxu0 %v293
    %316 = vmatprep.subr.bf16.mxu0 0
    %317 = vmatpush1.bf16.msra.mxu0 %v294
    %318 = vmatprep.subr.bf16.mxu0 0
    %319 = vmatpush1.bf16.msra.mxu0 %v295
    %320 = vmatprep.subr.bf16.mxu0 0
    %321 = vmatpush1.bf16.msra.mxu0 0
    %322 = vmatprep.subr.bf16.mxu0 0
    %323 = vmatpush1.bf16.msra.mxu0 0
    %324 = vmatprep.subr.bf16.mxu0 0
    %325 = vmatpush1.bf16.msra.mxu0 0
    %326 = vmatprep.subr.bf16.mxu0 0
    %327 = vmatpush1.bf16.msra.mxu0 0
    %328 = vmatprep.subr.bf16.mxu0 0
    %329 = vmatpush1.bf16.msra.mxu0 0
    %330 = vmatprep.subr.bf16.mxu0 0
    %331 = vmatpush1.bf16.msra.mxu0 0
    %332 = vmatprep.subr.bf16.mxu0 0
    %333 = vmatpush1.bf16.msra.mxu0 0
    %334 = vmatprep.subr.bf16.mxu0 0
    %335 = vmatpush1.bf16.msra.mxu0 0
    %336 = vmatprep.mubr.bf16.mxu0 0
    %337 = vmatmul.mubr.bf16.gmra.mrb[0].mxu0 %v232
    %v338 = vpop.f32.mrb[0].mxu0
    %v339 = vadd.f32 %v254, %v338
    %v340 = vpop.f32.mrb[0].mxu0
    %v341 = vpop.f32.mrb[0].mxu0
    %v342 = vadd.f32 %v254, %v341
    %v343 = vpop.f32.mrb[0].mxu0
    %344 = vdwg.mxu0
    %v345 = vand.u32 2147483647, %v339
    %v346 = vand.u32 2147483647, %v342
    %v347 = vsub.f32 0.0, %v345
    %v348 = vsub.f32 0.0, %v346
    %v349 = vmul.f32 %v347, 1.442695
    %v350 = vpow.pop %v349
    %v351 = vmul.f32 %v348, 1.442695
    %v352 = vpow.pop %v351
    %vm353 = vcmp.ge.f32.partialorder %v339, 0.0
    %vm354 = vcmp.ge.f32.partialorder %v342, 0.0
    %v355 = vsel %vm353, 1.0, %v350
    %v356 = vsel %vm354, 1.0, %v352
    %v357 = vadd.f32 %v350, 1.0
    %v358 = vadd.f32 %v352, 1.0
    %v359 = vrcp.pop %v357
    %v360 = vrcp.pop %v358
    %v361 = vmul.f32 %v355, %v359
    %v362 = vmul.f32 %v356, %v360
    %v363 = vmul.f32 %v230, %v361
    %v364 = vmul.f32 %v231, %v362
    %v365 = vpack.c.bf16 %v364, %v363
    %s366 = scalar_lea.vmem [#allocation5], 64
    %v367 = vld [vmem:[%s366] sm:$0xf]
    %v368 = vld [vmem:[%s366 + $0x4] sm:$0xf]
    %v369 = vld [vmem:[%s366 + $0x8] sm:$0xf]
    %v370 = vld [vmem:[%s366 + $0xc] sm:$0xf]
    %v371 = vld [vmem:[%s366 + $0x10] sm:$0xf]
    %v372 = vld [vmem:[%s366 + $0x14] sm:$0xf]
    %v373 = vld [vmem:[%s366 + $0x18] sm:$0xf]
    %v374 = vld [vmem:[%s366 + $0x1c] sm:$0xf]
    %v375 = vld [vmem:[%s366 + $0x20] sm:$0xf]
    %v376 = vld [vmem:[%s366 + $0x24] sm:$0xf]
    %v377 = vld [vmem:[%s366 + $0x28] sm:$0xf]
    %v378 = vld [vmem:[%s366 + $0x2c] sm:$0xf]
    %v379 = vld [vmem:[%s366 + $0x30] sm:$0xf]
    %v380 = vld [vmem:[%s366 + $0x34] sm:$0xf]
    %v381 = vld [vmem:[%s366 + $0x38] sm:$0xf]
    %v382 = vld [vmem:[%s366 + $0x3c] sm:$0xf]
    %s383 = scalar_lea.vmem %s2, 1
    %v384 = vld [vmem:[%s383] sm:$0x1]
    %v386 = vlaneseq
    %v387 = vshrl.u32 %v386, 7
    %v388 = vsub.s32 0, %v387
    %v389 = vrot.slane %v384, %v388
    %v407 = vunpack.c.l.b16 %v367
    %v408 = vunpack.c.l.b16 %v368
    %v409 = vunpack.c.l.b16 %v369
    %v410 = vunpack.c.l.b16 %v370
    %v411 = vunpack.c.l.b16 %v371
    %v412 = vunpack.c.l.b16 %v372
    %v413 = vunpack.c.l.b16 %v373
    %v414 = vunpack.c.l.b16 %v374
    %v415 = vunpack.c.l.b16 %v375
    %v416 = vunpack.c.l.b16 %v376
    %v417 = vunpack.c.l.b16 %v377
    %v418 = vunpack.c.l.b16 %v378
    %v419 = vunpack.c.l.b16 %v379
    %v420 = vunpack.c.l.b16 %v380
    %v421 = vunpack.c.l.b16 %v381
    %v422 = vunpack.c.l.b16 %v382
    %v423 = vpack.c.b16 %v408, %v407
    %v424 = vpack.c.b16 %v410, %v409
    %v425 = vpack.c.b16 %v412, %v411
    %v426 = vpack.c.b16 %v414, %v413
    %v427 = vpack.c.b16 %v416, %v415
    %v428 = vpack.c.b16 %v418, %v417
    %v429 = vpack.c.b16 %v420, %v419
    %v430 = vpack.c.b16 %v422, %v421
    %439 = vmatprep.subr.bf16.mxu0 0
    %440 = vmatpush1.bf16.msra.mxu0 %v423
    %441 = vmatprep.subr.bf16.mxu0 0
    %442 = vmatpush1.bf16.msra.mxu0 %v424
    %443 = vmatprep.subr.bf16.mxu0 0
    %444 = vmatpush1.bf16.msra.mxu0 %v425
    %445 = vmatprep.subr.bf16.mxu0 0
    %446 = vmatpush1.bf16.msra.mxu0 %v426
    %447 = vmatprep.subr.bf16.mxu0 0
    %448 = vmatpush1.bf16.msra.mxu0 %v427
    %449 = vmatprep.subr.bf16.mxu0 0
    %450 = vmatpush1.bf16.msra.mxu0 %v428
    %451 = vmatprep.subr.bf16.mxu0 0
    %452 = vmatpush1.bf16.msra.mxu0 %v429
    %453 = vmatprep.subr.bf16.mxu0 0
    %454 = vmatpush1.bf16.msra.mxu0 %v430
    %455 = vmatprep.subr.bf16.mxu0 0
    %456 = vmatpush1.bf16.msra.mxu0 0
    %457 = vmatprep.subr.bf16.mxu0 0
    %458 = vmatpush1.bf16.msra.mxu0 0
    %459 = vmatprep.subr.bf16.mxu0 0
    %460 = vmatpush1.bf16.msra.mxu0 0
    %461 = vmatprep.subr.bf16.mxu0 0
    %462 = vmatpush1.bf16.msra.mxu0 0
    %463 = vmatprep.subr.bf16.mxu0 0
    %464 = vmatpush1.bf16.msra.mxu0 0
    %465 = vmatprep.subr.bf16.mxu0 0
    %466 = vmatpush1.bf16.msra.mxu0 0
    %467 = vmatprep.subr.bf16.mxu0 0
    %468 = vmatpush1.bf16.msra.mxu0 0
    %469 = vmatprep.subr.bf16.mxu0 0
    %470 = vmatpush1.bf16.msra.mxu0 0
    %471 = vmatprep.mubr.bf16.mxu0 0
    %472 = vmatmul.mubr.bf16.gmra.mrb[0].mxu0 %v365
    %v473 = vpop.f32.mrb[0].mxu0
    %v474 = vadd.f32 %v389, %v473
    %v475 = vpop.f32.mrb[0].mxu0
    %v476 = vpop.f32.mrb[0].mxu0
    %v477 = vadd.f32 %v389, %v476
    %v478 = vpop.f32.mrb[0].mxu0
    %479 = vdwg.mxu0
    %v480 = vand.u32 2147483647, %v474
    %v481 = vand.u32 2147483647, %v477
    %v482 = vsub.f32 0.0, %v480
    %v483 = vsub.f32 0.0, %v481
    %v484 = vmul.f32 %v482, 1.442695
    %v485 = vpow.pop %v484
    %v486 = vmul.f32 %v483, 1.442695
    %v487 = vpow.pop %v486
    %vm488 = vcmp.ge.f32.partialorder %v474, 0.0
    %vm489 = vcmp.ge.f32.partialorder %v477, 0.0
    %v490 = vmul.f32 %v485, 2.0
    %v491 = vmul.f32 %v487, 2.0
    %v492 = vadd.f32 %v490, 1.0
    %v493 = vadd.f32 %v491, 1.0
    %v494 = vadd.f32 %v485, 2.0
    %v495 = vadd.f32 %v487, 2.0
    %v496 = vmul.f32 %v485, %v494
    %v497 = vmul.f32 %v487, %v495
    %v498 = vsel %vm488, %v492, %v496
    %v499 = vsel %vm489, %v493, %v497
    %v500 = vmul.f32 %v485, %v485
    %v501 = vmul.f32 %v487, %v487
    %v502 = vmul.f32 %v500, 2.0
    %v503 = vmul.f32 %v501, 2.0
    %v504 = vsel %vm488, %v502, 2.0
    %v505 = vsel %vm489, %v503, 2.0
    %v506 = vadd.f32 %v498, %v504
    %v507 = vadd.f32 %v499, %v505
    %v508 = vmul.f32 %v474, %v498
    %v509 = vmul.f32 %v477, %v499
    %v510 = vrcp.pop %v506
    %v511 = vrcp.pop %v507
    %v512 = vmul.f32 %v508, %v510
    %v513 = vmul.f32 %v509, %v511
    %v514 = vpack.c.bf16 %v513, %v512
    %s515 = scalar_lea.vmem [#allocation7], 64
    %v516 = vld [vmem:[%s515] sm:$0xf]
    %v517 = vld [vmem:[%s515 + $0x4] sm:$0xf]
    %v518 = vld [vmem:[%s515 + $0x8] sm:$0xf]
    %v519 = vld [vmem:[%s515 + $0xc] sm:$0xf]
    %v520 = vld [vmem:[%s515 + $0x10] sm:$0xf]
    %v521 = vld [vmem:[%s515 + $0x14] sm:$0xf]
    %v522 = vld [vmem:[%s515 + $0x18] sm:$0xf]
    %v523 = vld [vmem:[%s515 + $0x1c] sm:$0xf]
    %v524 = vld [vmem:[%s515 + $0x20] sm:$0xf]
    %v525 = vld [vmem:[%s515 + $0x24] sm:$0xf]
    %v526 = vld [vmem:[%s515 + $0x28] sm:$0xf]
    %v527 = vld [vmem:[%s515 + $0x2c] sm:$0xf]
    %v528 = vld [vmem:[%s515 + $0x30] sm:$0xf]
    %v529 = vld [vmem:[%s515 + $0x34] sm:$0xf]
    %v530 = vld [vmem:[%s515 + $0x38] sm:$0xf]
    %v531 = vld [vmem:[%s515 + $0x3c] sm:$0xf]
    %s532 = scalar_lea.vmem %s4, 1
    %v533 = vld [vmem:[%s532] sm:$0x1]
    %v535 = vlaneseq
    %v536 = vshrl.u32 %v535, 7
    %v537 = vsub.s32 0, %v536
    %v538 = vrot.slane %v533, %v537
    %v556 = vunpack.c.l.b16 %v516
    %v557 = vunpack.c.l.b16 %v517
    %v558 = vunpack.c.l.b16 %v518
    %v559 = vunpack.c.l.b16 %v519
    %v560 = vunpack.c.l.b16 %v520
    %v561 = vunpack.c.l.b16 %v521
    %v562 = vunpack.c.l.b16 %v522
    %v563 = vunpack.c.l.b16 %v523
    %v564 = vunpack.c.l.b16 %v524
    %v565 = vunpack.c.l.b16 %v525
    %v566 = vunpack.c.l.b16 %v526
    %v567 = vunpack.c.l.b16 %v527
    %v568 = vunpack.c.l.b16 %v528
    %v569 = vunpack.c.l.b16 %v529
    %v570 = vunpack.c.l.b16 %v530
    %v571 = vunpack.c.l.b16 %v531
    %v572 = vpack.c.b16 %v557, %v556
    %v573 = vpack.c.b16 %v559, %v558
    %v574 = vpack.c.b16 %v561, %v560
    %v575 = vpack.c.b16 %v563, %v562
    %v576 = vpack.c.b16 %v565, %v564
    %v577 = vpack.c.b16 %v567, %v566
    %v578 = vpack.c.b16 %v569, %v568
    %v579 = vpack.c.b16 %v571, %v570
    %588 = vmatprep.subr.bf16.mxu0 0
    %589 = vmatpush1.bf16.msra.mxu0 %v572
    %590 = vmatprep.subr.bf16.mxu0 0
    %591 = vmatpush1.bf16.msra.mxu0 %v573
    %592 = vmatprep.subr.bf16.mxu0 0
    %593 = vmatpush1.bf16.msra.mxu0 %v574
    %594 = vmatprep.subr.bf16.mxu0 0
    %595 = vmatpush1.bf16.msra.mxu0 %v575
    %596 = vmatprep.subr.bf16.mxu0 0
    %597 = vmatpush1.bf16.msra.mxu0 %v576
    %598 = vmatprep.subr.bf16.mxu0 0
    %599 = vmatpush1.bf16.msra.mxu0 %v577
    %600 = vmatprep.subr.bf16.mxu0 0
    %601 = vmatpush1.bf16.msra.mxu0 %v578
    %602 = vmatprep.subr.bf16.mxu0 0
    %603 = vmatpush1.bf16.msra.mxu0 %v579
    %604 = vmatprep.subr.bf16.mxu0 0
    %605 = vmatpush1.bf16.msra.mxu0 0
    %606 = vmatprep.subr.bf16.mxu0 0
    %607 = vmatpush1.bf16.msra.mxu0 0
    %608 = vmatprep.subr.bf16.mxu0 0
    %609 = vmatpush1.bf16.msra.mxu0 0
    %610 = vmatprep.subr.bf16.mxu0 0
    %611 = vmatpush1.bf16.msra.mxu0 0
    %612 = vmatprep.subr.bf16.mxu0 0
    %613 = vmatpush1.bf16.msra.mxu0 0
    %614 = vmatprep.subr.bf16.mxu0 0
    %615 = vmatpush1.bf16.msra.mxu0 0
    %616 = vmatprep.subr.bf16.mxu0 0
    %617 = vmatpush1.bf16.msra.mxu0 0
    %618 = vmatprep.subr.bf16.mxu0 0
    %619 = vmatpush1.bf16.msra.mxu0 0
    %620 = vmatprep.mubr.bf16.mxu0 0
    %621 = vmatmul.mubr.bf16.gmra.mrb[0].mxu0 %v514
    %v622 = vpop.f32.mrb[0].mxu0
    %v623 = vadd.f32 %v538, %v622
    %v624 = vpop.f32.mrb[0].mxu0
    %v625 = vpop.f32.mrb[0].mxu0
    %v626 = vadd.f32 %v538, %v625
    %v627 = vpop.f32.mrb[0].mxu0
    %628 = vdwg.mxu0
    %v629 = vand.u32 2147483647, %v623
    %v630 = vand.u32 2147483647, %v626
    %v631 = vsub.f32 0.0, %v629
    %v632 = vsub.f32 0.0, %v630
    %v633 = vmul.f32 %v631, 1.442695
    %v634 = vpow.pop %v633
    %v635 = vmul.f32 %v632, 1.442695
    %v636 = vpow.pop %v635
    %vm637 = vcmp.ge.f32.partialorder %v623, 0.0
    %vm638 = vcmp.ge.f32.partialorder %v626, 0.0
    %v639 = vsel %vm637, 1.0, %v634
    %v640 = vsel %vm638, 1.0, %v636
    %v641 = vadd.f32 %v634, 1.0
    %v642 = vadd.f32 %v636, 1.0
    %v643 = vrcp.pop %v641
    %v644 = vrcp.pop %v642
    %v645 = vmul.f32 %v639, %v643
    %v646 = vmul.f32 %v640, %v644
    %v647 = vmul.f32 %v512, %v645
    %v648 = vmul.f32 %v513, %v646
    %v649 = vpack.c.bf16 %v648, %v647
    %s650 = scalar_lea.vmem [#allocation5], 128
    %v651 = vld [vmem:[%s650] sm:$0xf]
    %v652 = vld [vmem:[%s650 + $0x4] sm:$0xf]
    %v653 = vld [vmem:[%s650 + $0x8] sm:$0xf]
    %v654 = vld [vmem:[%s650 + $0xc] sm:$0xf]
    %v655 = vld [vmem:[%s650 + $0x10] sm:$0xf]
    %v656 = vld [vmem:[%s650 + $0x14] sm:$0xf]
    %v657 = vld [vmem:[%s650 + $0x18] sm:$0xf]
    %v658 = vld [vmem:[%s650 + $0x1c] sm:$0xf]
    %v659 = vld [vmem:[%s650 + $0x20] sm:$0xf]
    %v660 = vld [vmem:[%s650 + $0x24] sm:$0xf]
    %v661 = vld [vmem:[%s650 + $0x28] sm:$0xf]
    %v662 = vld [vmem:[%s650 + $0x2c] sm:$0xf]
    %v663 = vld [vmem:[%s650 + $0x30] sm:$0xf]
    %v664 = vld [vmem:[%s650 + $0x34] sm:$0xf]
    %v665 = vld [vmem:[%s650 + $0x38] sm:$0xf]
    %v666 = vld [vmem:[%s650 + $0x3c] sm:$0xf]
    %s667 = scalar_lea.vmem %s2, 2
    %v668 = vld [vmem:[%s667] sm:$0x1]
    %v670 = vlaneseq
    %v671 = vshrl.u32 %v670, 7
    %v672 = vsub.s32 0, %v671
    %v673 = vrot.slane %v668, %v672
    %v691 = vunpack.c.l.b16 %v651
    %v692 = vunpack.c.l.b16 %v652
    %v693 = vunpack.c.l.b16 %v653
    %v694 = vunpack.c.l.b16 %v654
    %v695 = vunpack.c.l.b16 %v655
    %v696 = vunpack.c.l.b16 %v656
    %v697 = vunpack.c.l.b16 %v657
    %v698 = vunpack.c.l.b16 %v658
    %v699 = vunpack.c.l.b16 %v659
    %v700 = vunpack.c.l.b16 %v660
    %v701 = vunpack.c.l.b16 %v661
    %v702 = vunpack.c.l.b16 %v662
    %v703 = vunpack.c.l.b16 %v663
    %v704 = vunpack.c.l.b16 %v664
    %v705 = vunpack.c.l.b16 %v665
    %v706 = vunpack.c.l.b16 %v666
    %v707 = vpack.c.b16 %v692, %v691
    %v708 = vpack.c.b16 %v694, %v693
    %v709 = vpack.c.b16 %v696, %v695
    %v710 = vpack.c.b16 %v698, %v697
    %v711 = vpack.c.b16 %v700, %v699
    %v712 = vpack.c.b16 %v702, %v701
    %v713 = vpack.c.b16 %v704, %v703
    %v714 = vpack.c.b16 %v706, %v705
    %723 = vmatprep.subr.bf16.mxu0 0
    %724 = vmatpush1.bf16.msra.mxu0 %v707
    %725 = vmatprep.subr.bf16.mxu0 0
    %726 = vmatpush1.bf16.msra.mxu0 %v708
    %727 = vmatprep.subr.bf16.mxu0 0
    %728 = vmatpush1.bf16.msra.mxu0 %v709
    %729 = vmatprep.subr.bf16.mxu0 0
    %730 = vmatpush1.bf16.msra.mxu0 %v710
    %731 = vmatprep.subr.bf16.mxu0 0
    %732 = vmatpush1.bf16.msra.mxu0 %v711
    %733 = vmatprep.subr.bf16.mxu0 0
    %734 = vmatpush1.bf16.msra.mxu0 %v712
    %735 = vmatprep.subr.bf16.mxu0 0
    %736 = vmatpush1.bf16.msra.mxu0 %v713
    %737 = vmatprep.subr.bf16.mxu0 0
    %738 = vmatpush1.bf16.msra.mxu0 %v714
    %739 = vmatprep.subr.bf16.mxu0 0
    %740 = vmatpush1.bf16.msra.mxu0 0
    %741 = vmatprep.subr.bf16.mxu0 0
    %742 = vmatpush1.bf16.msra.mxu0 0
    %743 = vmatprep.subr.bf16.mxu0 0
    %744 = vmatpush1.bf16.msra.mxu0 0
    %745 = vmatprep.subr.bf16.mxu0 0
    %746 = vmatpush1.bf16.msra.mxu0 0
    %747 = vmatprep.subr.bf16.mxu0 0
    %748 = vmatpush1.bf16.msra.mxu0 0
    %749 = vmatprep.subr.bf16.mxu0 0
    %750 = vmatpush1.bf16.msra.mxu0 0
    %751 = vmatprep.subr.bf16.mxu0 0
    %752 = vmatpush1.bf16.msra.mxu0 0
    %753 = vmatprep.subr.bf16.mxu0 0
    %754 = vmatpush1.bf16.msra.mxu0 0
    %755 = vmatprep.mubr.bf16.mxu0 0
    %756 = vmatmul.mubr.bf16.gmra.mrb[0].mxu0 %v649
    %v757 = vpop.f32.mrb[0].mxu0
    %v758 = vadd.f32 %v673, %v757
    %v759 = vpop.f32.mrb[0].mxu0
    %v760 = vpop.f32.mrb[0].mxu0
    %v761 = vadd.f32 %v673, %v760
    %v762 = vpop.f32.mrb[0].mxu0
    %763 = vdwg.mxu0
    %v764 = vand.u32 2147483647, %v758
    %v765 = vand.u32 2147483647, %v761
    %v766 = vsub.f32 0.0, %v764
    %v767 = vsub.f32 0.0, %v765
    %v768 = vmul.f32 %v766, 1.442695
    %v769 = vpow.pop %v768
    %v770 = vmul.f32 %v767, 1.442695
    %v771 = vpow.pop %v770
    %vm772 = vcmp.ge.f32.partialorder %v758, 0.0
    %vm773 = vcmp.ge.f32.partialorder %v761, 0.0
    %v774 = vmul.f32 %v769, 2.0
    %v775 = vmul.f32 %v771, 2.0
    %v776 = vadd.f32 %v774, 1.0
    %v777 = vadd.f32 %v775, 1.0
    %v778 = vadd.f32 %v769, 2.0
    %v779 = vadd.f32 %v771, 2.0
    %v780 = vmul.f32 %v769, %v778
    %v781 = vmul.f32 %v771, %v779
    %v782 = vsel %vm772, %v776, %v780
    %v783 = vsel %vm773, %v777, %v781
    %v784 = vmul.f32 %v769, %v769
    %v785 = vmul.f32 %v771, %v771
    %v786 = vmul.f32 %v784, 2.0
    %v787 = vmul.f32 %v785, 2.0
    %v788 = vsel %vm772, %v786, 2.0
    %v789 = vsel %vm773, %v787, 2.0
    %v790 = vadd.f32 %v782, %v788
    %v791 = vadd.f32 %v783, %v789
    %v792 = vmul.f32 %v758, %v782
    %v793 = vmul.f32 %v761, %v783
    %v794 = vrcp.pop %v790
    %v795 = vrcp.pop %v791
    %v796 = vmul.f32 %v792, %v794
    %v797 = vmul.f32 %v793, %v795
    %v798 = vpack.c.bf16 %v797, %v796
    %s799 = scalar_lea.vmem [#allocation7], 128
    %v800 = vld [vmem:[%s799] sm:$0xf]
    %v801 = vld [vmem:[%s799 + $0x4] sm:$0xf]
    %v802 = vld [vmem:[%s799 + $0x8] sm:$0xf]
    %v803 = vld [vmem:[%s799 + $0xc] sm:$0xf]
    %v804 = vld [vmem:[%s799 + $0x10] sm:$0xf]
    %v805 = vld [vmem:[%s799 + $0x14] sm:$0xf]
    %v806 = vld [vmem:[%s799 + $0x18] sm:$0xf]
    %v807 = vld [vmem:[%s799 + $0x1c] sm:$0xf]
    %v808 = vld [vmem:[%s799 + $0x20] sm:$0xf]
    %v809 = vld [vmem:[%s799 + $0x24] sm:$0xf]
    %v810 = vld [vmem:[%s799 + $0x28] sm:$0xf]
    %v811 = vld [vmem:[%s799 + $0x2c] sm:$0xf]
    %v812 = vld [vmem:[%s799 + $0x30] sm:$0xf]
    %v813 = vld [vmem:[%s799 + $0x34] sm:$0xf]
    %v814 = vld [vmem:[%s799 + $0x38] sm:$0xf]
    %v815 = vld [vmem:[%s799 + $0x3c] sm:$0xf]
    %s816 = scalar_lea.vmem %s4, 2
    %v817 = vld [vmem:[%s816] sm:$0x1]
    %v819 = vlaneseq
    %v820 = vshrl.u32 %v819, 7
    %v821 = vsub.s32 0, %v820
    %v822 = vrot.slane %v817, %v821
    %v840 = vunpack.c.l.b16 %v800
    %v841 = vunpack.c.l.b16 %v801
    %v842 = vunpack.c.l.b16 %v802
    %v843 = vunpack.c.l.b16 %v803
    %v844 = vunpack.c.l.b16 %v804
    %v845 = vunpack.c.l.b16 %v805
    %v846 = vunpack.c.l.b16 %v806
    %v847 = vunpack.c.l.b16 %v807
    %v848 = vunpack.c.l.b16 %v808
    %v849 = vunpack.c.l.b16 %v809
    %v850 = vunpack.c.l.b16 %v810
    %v851 = vunpack.c.l.b16 %v811
    %v852 = vunpack.c.l.b16 %v812
    %v853 = vunpack.c.l.b16 %v813
    %v854 = vunpack.c.l.b16 %v814
    %v855 = vunpack.c.l.b16 %v815
    %v856 = vpack.c.b16 %v841, %v840
    %v857 = vpack.c.b16 %v843, %v842
    %v858 = vpack.c.b16 %v845, %v844
    %v859 = vpack.c.b16 %v847, %v846
    %v860 = vpack.c.b16 %v849, %v848
    %v861 = vpack.c.b16 %v851, %v850
    %v862 = vpack.c.b16 %v853, %v852
    %v863 = vpack.c.b16 %v855, %v854
    %872 = vmatprep.subr.bf16.mxu0 0
    %873 = vmatpush1.bf16.msra.mxu0 %v856
    %874 = vmatprep.subr.bf16.mxu0 0
    %875 = vmatpush1.bf16.msra.mxu0 %v857
    %876 = vmatprep.subr.bf16.mxu0 0
    %877 = vmatpush1.bf16.msra.mxu0 %v858
    %878 = vmatprep.subr.bf16.mxu0 0
    %879 = vmatpush1.bf16.msra.mxu0 %v859
    %880 = vmatprep.subr.bf16.mxu0 0
    %881 = vmatpush1.bf16.msra.mxu0 %v860
    %882 = vmatprep.subr.bf16.mxu0 0
    %883 = vmatpush1.bf16.msra.mxu0 %v861
    %884 = vmatprep.subr.bf16.mxu0 0
    %885 = vmatpush1.bf16.msra.mxu0 %v862
    %886 = vmatprep.subr.bf16.mxu0 0
    %887 = vmatpush1.bf16.msra.mxu0 %v863
    %888 = vmatprep.subr.bf16.mxu0 0
    %889 = vmatpush1.bf16.msra.mxu0 0
    %890 = vmatprep.subr.bf16.mxu0 0
    %891 = vmatpush1.bf16.msra.mxu0 0
    %892 = vmatprep.subr.bf16.mxu0 0
    %893 = vmatpush1.bf16.msra.mxu0 0
    %894 = vmatprep.subr.bf16.mxu0 0
    %895 = vmatpush1.bf16.msra.mxu0 0
    %896 = vmatprep.subr.bf16.mxu0 0
    %897 = vmatpush1.bf16.msra.mxu0 0
    %898 = vmatprep.subr.bf16.mxu0 0
    %899 = vmatpush1.bf16.msra.mxu0 0
    %900 = vmatprep.subr.bf16.mxu0 0
    %901 = vmatpush1.bf16.msra.mxu0 0
    %902 = vmatprep.subr.bf16.mxu0 0
    %903 = vmatpush1.bf16.msra.mxu0 0
    %904 = vmatprep.mubr.bf16.mxu0 0
    %905 = vmatmul.mubr.bf16.gmra.mrb[0].mxu0 %v798
    %v906 = vpop.f32.mrb[0].mxu0
    %v907 = vadd.f32 %v822, %v906
    %v908 = vpop.f32.mrb[0].mxu0
    %v909 = vpop.f32.mrb[0].mxu0
    %v910 = vadd.f32 %v822, %v909
    %v911 = vpop.f32.mrb[0].mxu0
    %912 = vdwg.mxu0
    %v913 = vand.u32 2147483647, %v907
    %v914 = vand.u32 2147483647, %v910
    %v915 = vsub.f32 0.0, %v913
    %v916 = vsub.f32 0.0, %v914
    %v917 = vmul.f32 %v915, 1.442695
    %v918 = vpow.pop %v917
    %v919 = vmul.f32 %v916, 1.442695
    %v920 = vpow.pop %v919
    %vm921 = vcmp.ge.f32.partialorder %v907, 0.0
    %vm922 = vcmp.ge.f32.partialorder %v910, 0.0
    %v923 = vsel %vm921, 1.0, %v918
    %v924 = vsel %vm922, 1.0, %v920
    %v925 = vadd.f32 %v918, 1.0
    %v926 = vadd.f32 %v920, 1.0
    %v927 = vrcp.pop %v925
    %v928 = vrcp.pop %v926
    %v929 = vmul.f32 %v923, %v927
    %v930 = vmul.f32 %v924, %v928
    %v931 = vmul.f32 %v796, %v929
    %v932 = vmul.f32 %v797, %v930
    %v933 = vpack.c.bf16 %v932, %v931
    %v934 = vld [vmem:[#allocation8] sm:$0xf]
    %v935 = vld [vmem:[#allocation8 + $0x4] sm:$0xf]
    %v936 = vld [vmem:[#allocation8 + $0x8] sm:$0xf]
    %v937 = vld [vmem:[#allocation8 + $0xc] sm:$0xf]
    %v938 = vld [vmem:[#allocation8 + $0x10] sm:$0xf]
    %v939 = vld [vmem:[#allocation8 + $0x14] sm:$0xf]
    %v940 = vld [vmem:[#allocation8 + $0x18] sm:$0xf]
    %v941 = vld [vmem:[#allocation8 + $0x1c] sm:$0xf]
    %v942 = vld [vmem:[#allocation8 + $0x20] sm:$0xf]
    %v943 = vld [vmem:[#allocation8 + $0x24] sm:$0xf]
    %v944 = vld [vmem:[#allocation8 + $0x28] sm:$0xf]
    %v945 = vld [vmem:[#allocation8 + $0x2c] sm:$0xf]
    %v946 = vld [vmem:[#allocation8 + $0x30] sm:$0xf]
    %v947 = vld [vmem:[#allocation8 + $0x34] sm:$0xf]
    %v948 = vld [vmem:[#allocation8 + $0x38] sm:$0xf]
    %v949 = vld [vmem:[#allocation8 + $0x3c] sm:$0xf]
    %v950 = vld [vmem:[%s6] sm:$0x1]
    %v952 = vlaneseq
    %v953 = vshrl.u32 %v952, 7
    %v954 = vsub.s32 0, %v953
    %v955 = vrot.slane %v950, %v954
    %v973 = vunpack.c.l.b16 %v934
    %v974 = vunpack.c.l.b16 %v935
    %v975 = vunpack.c.l.b16 %v936
    %v976 = vunpack.c.l.b16 %v937
    %v977 = vunpack.c.l.b16 %v938
    %v978 = vunpack.c.l.b16 %v939
    %v979 = vunpack.c.l.b16 %v940
    %v980 = vunpack.c.l.b16 %v941
    %v981 = vunpack.c.l.b16 %v942
    %v982 = vunpack.c.l.b16 %v943
    %v983 = vunpack.c.l.b16 %v944
    %v984 = vunpack.c.l.b16 %v945
    %v985 = vunpack.c.l.b16 %v946
    %v986 = vunpack.c.l.b16 %v947
    %v987 = vunpack.c.l.b16 %v948
    %v988 = vunpack.c.l.b16 %v949
    %v989 = vpack.c.b16 %v974, %v973
    %v990 = vpack.c.b16 %v976, %v975
    %v991 = vpack.c.b16 %v978, %v977
    %v992 = vpack.c.b16 %v980, %v979
    %v993 = vpack.c.b16 %v982, %v981
    %v994 = vpack.c.b16 %v984, %v983
    %v995 = vpack.c.b16 %v986, %v985
    %v996 = vpack.c.b16 %v988, %v987
    %1005 = vmatprep.subr.bf16.mxu0 0
    %1006 = vmatpush1.bf16.msra.mxu0 %v989
    %1007 = vmatprep.subr.bf16.mxu0 0
    %1008 = vmatpush1.bf16.msra.mxu0 %v990
    %1009 = vmatprep.subr.bf16.mxu0 0
    %1010 = vmatpush1.bf16.msra.mxu0 %v991
    %1011 = vmatprep.subr.bf16.mxu0 0
    %1012 = vmatpush1.bf16.msra.mxu0 %v992
    %1013 = vmatprep.subr.bf16.mxu0 0
    %1014 = vmatpush1.bf16.msra.mxu0 %v993
    %1015 = vmatprep.subr.bf16.mxu0 0
    %1016 = vmatpush1.bf16.msra.mxu0 %v994
    %1017 = vmatprep.subr.bf16.mxu0 0
    %1018 = vmatpush1.bf16.msra.mxu0 %v995
    %1019 = vmatprep.subr.bf16.mxu0 0
    %1020 = vmatpush1.bf16.msra.mxu0 %v996
    %1021 = vmatprep.subr.bf16.mxu0 0
    %1022 = vmatpush1.bf16.msra.mxu0 0
    %1023 = vmatprep.subr.bf16.mxu0 0
    %1024 = vmatpush1.bf16.msra.mxu0 0
    %1025 = vmatprep.subr.bf16.mxu0 0
    %1026 = vmatpush1.bf16.msra.mxu0 0
    %1027 = vmatprep.subr.bf16.mxu0 0
    %1028 = vmatpush1.bf16.msra.mxu0 0
    %1029 = vmatprep.subr.bf16.mxu0 0
    %1030 = vmatpush1.bf16.msra.mxu0 0
    %1031 = vmatprep.subr.bf16.mxu0 0
    %1032 = vmatpush1.bf16.msra.mxu0 0
    %1033 = vmatprep.subr.bf16.mxu0 0
    %1034 = vmatpush1.bf16.msra.mxu0 0
    %1035 = vmatprep.subr.bf16.mxu0 0
    %1036 = vmatpush1.bf16.msra.mxu0 0
    %1037 = vmatprep.mubr.bf16.mxu0 0
    %1038 = vmatmul.mubr.bf16.gmra.mrb[0].mxu0 %v933
    %v1039 = vpop.f32.mrb[0].mxu0
    %v1040 = vadd.f32 %v955, %v1039
    %v1041 = vpop.f32.mrb[0].mxu0
    %v1042 = vpop.f32.mrb[0].mxu0
    %v1043 = vadd.f32 %v955, %v1042
    %v1044 = vpop.f32.mrb[0].mxu0
    %1045 = vdwg.mxu0
    %1046 = vst [vmem:[#allocation10] sm:$0xff] %v1040
    %1047 = vst [vmem:[#allocation10 + $0x8] sm:$0xff] %v1043
    // Predicated region
    $region46: #{tpu_custom_call.1} parent=1 // pred_check
      _
    $region47: #{tpu_custom_call.1} parent=1 // pred_check_branch
      %1049 = sbr.rel (0) target = $region49
    $region48: #{tpu_custom_call.1} parent=1 // pred_region
      %s1051 = ssub.s32 256, 256
      %1052 = vsyncadd [#allocation4], %s1051
      %s1053 = sshll.u32 [#allocation10], 4
      %s1054 = int_to_ptr.vmem [resolvable:$true] %s1053
      %1059 = dma.vmem_to_hbm [thread:$0]  %s1054, 256, %s7, [#allocation4], 128, 128, 8
    $region49: #{tpu_custom_call.1} parent=1 // pred_fallthru
      _
    // Predicated region
    $region50: #{tpu_custom_call.1} parent=1 // pred_check
      _
    $region51: #{tpu_custom_call.1} parent=1 // pred_check_branch
      %1061 = sbr.rel (0) target = $region53
    $region52: #{tpu_custom_call.1} parent=1 // pred_region
      %1062 = dma.done [#allocation4], 256
    $region53: #{tpu_custom_call.1} parent=1 // pred_fallthru
      _
    %1063 = vsyncpa [#allocation3], 1
    %1064 = vsyncpa [#allocation6], 1
    %1065 = vsyncpa [#allocation9], 1
    %1066 = vsyncpa [#allocation4], 1

</llo_original>
